<compile_context>
chip_gen: v6e
topology: v6e:2x2x1
jax: 0.10.0
libtpu: 0.0.40
codegen_flags: <defaults>
</compile_context>

<pallas_src>
import functools
import math

import numpy as np
import jax
import jax.numpy as jnp
from jax.experimental import pallas as pl
from jax.experimental.pallas import tpu as pltpu

_MIB = 1024 * 1024


def _round_up(x, m):
    return (x + m - 1) // m * m


@functools.lru_cache(maxsize=None)
def adaptive_pool_matrix(H, W, scales, l_pad=None):
    """Pooling matrix P [L(_pad), H*W] replicating AdaptiveAvgPool2d -> flatten -> cat."""
    rows = []
    for s in scales:
        for i in range(s):
            h0 = (i * H) // s
            h1 = math.ceil((i + 1) * H / s)
            for j in range(s):
                w0 = (j * W) // s
                w1 = math.ceil((j + 1) * W / s)
                m = np.zeros((H, W), dtype=np.float32)
                m[h0:h1, w0:w1] = 1.0 / float((h1 - h0) * (w1 - w0))
                rows.append(m.reshape(-1))
    P = np.stack(rows, axis=0)
    if l_pad is not None and l_pad > P.shape[0]:
        P = np.concatenate(
            [P, np.zeros((l_pad - P.shape[0], H * W), np.float32)], axis=0)
    return P


# --------------------------------------------------------------------------
# Kernel 1: key/value projection + PPMConcat pooling (once per batch element)
# --------------------------------------------------------------------------
def _kv_kernel(xl_ref, p_ref, wkv_ref, bkv_ref, keyt_ref, val_ref, acc_ref, *, cp):
    f32 = jnp.float32
    s = pl.program_id(1)

    @pl.when(s == 0)
    def _():
        acc_ref[...] = jnp.zeros_like(acc_ref)

    xl = xl_ref[0]                                              # [ts, Cl] bf16
    kv = jnp.dot(xl, wkv_ref[...],
                 preferred_element_type=f32) + bkv_ref[...]     # [ts, 2Cp] f32
    # ReLU only on the key half (ConvModule act); value_project is a plain conv.
    lane = jax.lax.broadcasted_iota(jnp.int32, kv.shape, 1)
    kv = jnp.where(lane < cp, jnp.maximum(kv, 0.0), kv)
    # PPMConcat adaptive-avg pools of all scales folded into one f32 matmul;
    # P columns for padded Sl rows are zero, so padded rows contribute nothing.
    acc_ref[...] += jnp.dot(p_ref[...], kv, preferred_element_type=f32)

    @pl.when(s == pl.num_programs(1) - 1)
    def _():
        pooled = acc_ref[...]                                   # [Lp, 2Cp] f32
        keyt_ref[0] = pooled[:, :cp].T.astype(keyt_ref.dtype)   # [Cp, Lp]
        val_ref[0] = pooled[:, cp:].astype(val_ref.dtype)       # [Lp, Cp]


# --------------------------------------------------------------------------
# Kernel 2: query projection + attention + out_project/bottleneck (per tile)
# --------------------------------------------------------------------------
def _attn_kernel(xh_ref, keyt_ref, val_ref, lmask_ref,
                 wq_ref, bq_ref, wctx_ref, bout_ref, wbh_ref, out_ref):
    f32 = jnp.float32
    cdt = keyt_ref.dtype

    xh = xh_ref[0]                                              # [TQ, Ch] bf16
    # query_project (conv+BN+ReLU); matmul_norm scale already folded into wq/bq.
    q = jnp.maximum(
        jnp.dot(xh, wq_ref[...], preferred_element_type=f32) + bq_ref[...], 0.0)

    # q @ key^T with key pre-transposed [Cp, Lp] -> plain matmul, no per-tile
    # relayout. Padded L columns masked via an additive bias row.
    sim = jnp.dot(q.astype(cdt), keyt_ref[0],
                  preferred_element_type=f32) + lmask_ref[...]  # [TQ, Lp]
    sim = sim - jnp.max(sim, axis=-1, keepdims=True)
    e = jnp.exp(sim)
    att = e * pl.reciprocal(jnp.sum(e, axis=-1, keepdims=True), approx=True)

    ctx = jnp.dot(att.astype(cdt), val_ref[0],
                  preferred_element_type=f32)                   # [TQ, Cp]

    # bottleneck on concat([context, high_feats]) as a split matmul; out_project
    # is folded into wctx/bout on the host (exact, all linear).
    out = (jnp.dot(ctx.astype(cdt), wctx_ref[...], preferred_element_type=f32)
           + jnp.dot(xh, wbh_ref[...], preferred_element_type=f32)
           + bout_ref[...])
    out_ref[0] = out.astype(out_ref.dtype)


# --------------------------------------------------------------------------
# Host-side weight preparation (BN folding done in init; here: pad / fuse / scale)
# --------------------------------------------------------------------------
def _prep_weights(params, C, Co, Cp, Cop, compute_dtype):
    hp = jax.lax.Precision.HIGHEST
    f32 = jnp.float32
    scale = float(C) ** -0.5

    def padc(w, cols):
        return jnp.pad(w, [(0, 0)] * (w.ndim - 1) + [(0, cols - w.shape[-1])])

    # matmul_norm scale folded into the query projection (ReLU commutes with a
    # positive scalar, and q only feeds q @ key^T) -> exact.
    wq = padc(params["wq"] * scale, Cp).astype(compute_dtype)         # [Ch, Cp]
    bq = padc(params["bq"] * scale, Cp).astype(f32)                   # [1, Cp]
    wkv = jnp.concatenate([padc(params["wk"], Cp), padc(params["wv"], Cp)],
                          axis=1).astype(compute_dtype)               # [Cl, 2Cp]
    bkv = jnp.concatenate([padc(params["bk"], Cp), padc(params["bv"], Cp)],
                          axis=1).astype(f32)                         # [1, 2Cp]
    # out_project folded into the bottleneck's context branch. Exact only
    # because there is no activation/norm between out_project and the
    # bottleneck conv (true for this module: value_out_norm=False, act=None).
    w_ctx = jnp.dot(params["wo"], params["wbc"], precision=hp)        # [C, Co]
    b_out = jnp.dot(params["bo"], params["wbc"], precision=hp) + params["bb"]
    w_ctx = jnp.pad(w_ctx, ((0, Cp - C), (0, Cop - Co))).astype(compute_dtype)
    b_out = padc(b_out, Cop).astype(f32)                              # [1, Cop]
    wbh = padc(params["wbh"], Cop).astype(compute_dtype)              # [Ch, Cop]
    return wq, bq, wkv, bkv, w_ctx, b_out, wbh


# --------------------------------------------------------------------------
# VMEM budgeting (shape-derived, conservative; holds on v7x's 64 MiB)
# --------------------------------------------------------------------------
def _kv_vmem_bytes(ts, cl, lp, cp):
    return (2 * 2 * ts * cl            # xl double-buffer (bf16)
            + 2 * 4 * lp * ts          # P double-buffer (f32)
            + 2 * 2 * cl * 2 * cp      # wkv
            + 2 * 4 * 2 * cp           # bkv
            + 4 * lp * 2 * cp          # f32 accumulator scratch
            + 2 * 2 * 2 * cp * lp      # keyT/val output buffers
            + 2 * 4 * ts * 2 * cp)     # kv f32 intermediate (+slack)


def _attn_vmem_bytes(tq, ch, cp, cop, lp):
    fixed = (2 * 2 * (cp * lp + lp * cp + ch * cp + cp * cop + ch * cop)
             + 2 * 4 * (lp + cp + cop))
    tiles = 2 * 2 * tq * ch + 2 * 2 * tq * cop
    interm = 4 * tq * (cp + 2 * lp + cp + cop)
    return fixed + tiles + interm


def _choose_sl_tile(Sl, Cl, Lp, Cp, budget=40 * _MIB):
    if Sl <= 2048:
        return Sl, Sl                   # full-extent block, no (8,128) concern
    ts = 2048
    while ts > 256 and _kv_vmem_bytes(ts, Cl, Lp, Cp) > budget:
        ts //= 2                        # stays a multiple of 128
    return ts, _round_up(Sl, ts)


# --------------------------------------------------------------------------
# Wrapper
# --------------------------------------------------------------------------
def afnb_forward(low_feats, high_feats, params, pool_scales=(1, 3, 6, 8),
                 tq=1024, compute_dtype=jnp.bfloat16, channels_last=False):
    """AFNB forward. NCHW in/out by default; channels_last=True takes/returns NHWC
    and skips the wrapper-side HBM transposes."""
    if channels_last:
        N, Hl, Wl, Cl = low_feats.shape
        N2, Hh, Wh, Ch = high_feats.shape
        xl = low_feats.reshape(N, Hl * Wl, Cl)
        xh = high_feats.reshape(N2, Hh * Wh, Ch)
    else:
        N, Cl, Hl, Wl = low_feats.shape
        N2, Ch, Hh, Wh = high_feats.shape
        xl = jnp.transpose(low_feats, (0, 2, 3, 1)).reshape(N, Hl * Wl, Cl)
        xh = jnp.transpose(high_feats, (0, 2, 3, 1)).reshape(N2, Hh * Wh, Ch)
    assert N == N2

    Sl, Sq = Hl * Wl, Hh * Wh
    C = params["wq"].shape[1]
    Co = params["wo"].shape[1]
    Cp, Cop = _round_up(C, 128), _round_up(Co, 128)
    L = sum(s * s for s in pool_scales)
    Lp = _round_up(L, 128)

    wq, bq, wkv, bkv, w_ctx, b_out, wbh = _prep_weights(
        params, C, Co, Cp, Cop, compute_dtype)

    # ---------------- K/V producer (small, per-batch) ----------------
    ts, Sl_pad = _choose_sl_tile(Sl, Cl, Lp, Cp)
    xl_c = xl.astype(compute_dtype)
    if Sl_pad != Sl:
        xl_c = jnp.pad(xl_c, ((0, 0), (0, Sl_pad - Sl), (0, 0)))
    P = adaptive_pool_matrix(Hl, Wl, tuple(pool_scales), Lp)
    if Sl_pad != Sl:
        P = np.pad(P, ((0, 0), (0, Sl_pad - Sl)))
    P = jnp.asarray(P, jnp.float32)     # keep pool weights f32 for parity

    n_s = Sl_pad // ts
    kv_limit = int(min(64 * _MIB, max(16 * _MIB,
                                      2 * _kv_vmem_bytes(ts, Cl, Lp, Cp))))
    keyt, val = pl.pallas_call(
        functools.partial(_kv_kernel, cp=Cp),
        out_shape=(jax.ShapeDtypeStruct((N, Cp, Lp), compute_dtype),
                   jax.ShapeDtypeStruct((N, Lp, Cp), compute_dtype)),
        grid_spec=pltpu.PrefetchScalarGridSpec(
            num_scalar_prefetch=0,
            grid=(N, n_s),
            in_specs=[
                pl.BlockSpec((1, ts, Cl), lambda b, s: (b, s, 0)),
                pl.BlockSpec((Lp, ts), lambda b, s: (0, s)),
                pl.BlockSpec(wkv.shape, lambda b, s: (0, 0)),
                pl.BlockSpec(bkv.shape, lambda b, s: (0, 0)),
            ],
            out_specs=(pl.BlockSpec((1, Cp, Lp), lambda b, s: (b, 0, 0)),
                       pl.BlockSpec((1, Lp, Cp), lambda b, s: (b, 0, 0))),
            scratch_shapes=[pltpu.VMEM((Lp, 2 * Cp), jnp.float32)],
        ),
        compiler_params=pltpu.CompilerParams(
            dimension_semantics=("parallel", "arbitrary"),
            vmem_limit_bytes=kv_limit),
    )(xl_c, P, wkv, bkv)

    # ---------------- attention + bottleneck (query-tiled) ----------------
    tq = max(8, _round_up(min(tq, _round_up(Sq, 8)), 8))
    while tq > 256 and _attn_vmem_bytes(tq, Ch, Cp, Cop, Lp) > 40 * _MIB:
        tq = max(256, _round_up(tq // 2, 8))
    Sq_pad = _round_up(Sq, tq)
    n_q = Sq_pad // tq

    xh_c = xh.astype(compute_dtype)
    if Sq_pad != Sq:
        xh_c = jnp.pad(xh_c, ((0, 0), (0, Sq_pad - Sq), (0, 0)))

    # Additive softmax mask for padded L columns (precomputed, one add per tile).
    lmask = jnp.where(jnp.arange(Lp) < L, 0.0, -1e30).astype(jnp.float32)[None, :]

    def rep(arr):
        nd = arr.ndim
        return pl.BlockSpec(arr.shape, lambda b, qi, _nd=nd: (0,) * _nd)

    attn_limit = int(min(64 * _MIB, max(16 * _MIB,
                                        2 * _attn_vmem_bytes(tq, Ch, Cp, Cop, Lp))))
    out = pl.pallas_call(
        _attn_kernel,
        out_shape=jax.ShapeDtypeStruct((N, Sq_pad, Cop), compute_dtype),
        grid_spec=pltpu.PrefetchScalarGridSpec(
            num_scalar_prefetch=0,
            grid=(N, n_q),
            in_specs=[
                pl.BlockSpec((1, tq, Ch), lambda b, qi: (b, qi, 0)),   # xh tile
                pl.BlockSpec((1, Cp, Lp), lambda b, qi: (b, 0, 0)),    # key^T
                pl.BlockSpec((1, Lp, Cp), lambda b, qi: (b, 0, 0)),    # value
                rep(lmask), rep(wq), rep(bq), rep(w_ctx), rep(b_out), rep(wbh),
            ],
            out_specs=pl.BlockSpec((1, tq, Cop), lambda b, qi: (b, qi, 0)),
        ),
        compiler_params=pltpu.CompilerParams(
            dimension_semantics=("parallel", "parallel"),
            vmem_limit_bytes=attn_limit),
    )(xh_c, keyt, val, lmask, wq, bq, w_ctx, b_out, wbh)

    if Sq_pad != Sq:
        out = out[:, :Sq]
    if Cop != Co:
        out = out[..., :Co]
    out = out.reshape(N, Hh, Wh, Co)
    if not channels_last:
        out = jnp.transpose(out, (0, 3, 1, 2))
    return out


# --------------------------------------------------------------------------
# Synthetic parameters (1x1 convs + eval-mode BN, fused) and f32 reference
# --------------------------------------------------------------------------
def init_afnb_params(key, low_in, high_in, channels, out_channels, eps=1e-5):
    keys = iter(jax.random.split(key, 32))

    def nrm(shape, s=0.2):
        return jax.random.normal(next(keys), shape, jnp.float32) * s

    def conv_bn(cin, cout):
        # ConvModule: 1x1 conv (bias=False, norm follows) + BatchNorm (eval mode).
        w = nrm((cin, cout))
        gamma = 1.0 + nrm((cout,), 0.1)
        beta = nrm((cout,), 0.1)
        mean = nrm((cout,), 0.1)
        var = 1.0 + jnp.abs(nrm((cout,), 0.1))
        s_bn = gamma / jnp.sqrt(var + eps)
        return w * s_bn[None, :], (beta - mean * s_bn)[None, :]

    def conv_bias(cin, cout):
        return nrm((cin, cout)), nrm((cout,), 0.1)[None, :]

    wq, bq = conv_bn(high_in, channels)                     # query_project (ConvModule)
    wk, bk = conv_bn(low_in, channels)                      # key_project   (ConvModule)
    wv, bv = conv_bias(low_in, channels)                    # value_project (plain conv)
    wo, bo = conv_bias(channels, out_channels)              # out_project   (plain conv)
    wb, bb = conv_bn(out_channels + high_in, out_channels)  # bottleneck (conv+BN, no act)
    return dict(wq=wq, bq=bq, wk=wk, bk=bk, wv=wv, bv=bv, wo=wo, bo=bo,
                wbc=wb[:out_channels], wbh=wb[out_channels:], bb=bb)


def afnb_reference(low_feats, high_feats, params, pool_scales=(1, 3, 6, 8)):
    """Pure-JAX f32 reference of the same math (sanity check)."""
    N, Cl, Hl, Wl = low_feats.shape
    _, Ch, Hh, Wh = high_feats.shape
    Sq, Sl = Hh * Wh, Hl * Wl
    C = params["wq"].shape[1]
    Co = params["wo"].shape[1]
    hp = jax.lax.Precision.HIGHEST
    xh = jnp.transpose(high_feats, (0, 2, 3, 1)).reshape(N, Sq, Ch)
    xl = jnp.transpose(low_feats, (0, 2, 3, 1)).reshape(N, Sl, Cl)
    P = jnp.asarray(adaptive_pool_matrix(Hl, Wl, tuple(pool_scales)))
    mm = lambda a, b: jnp.einsum("nsc,cd->nsd", a, b, precision=hp)
    q = jax.nn.relu(mm(xh, params["wq"]) + params["bq"])
    kp = jax.nn.relu(mm(xl, params["wk"]) + params["bk"])
    vp = mm(xl, params["wv"]) + params["bv"]
    key = jnp.einsum("ls,nsc->nlc", P, kp, precision=hp)
    val = jnp.einsum("ls,nsc->nlc", P, vp, precision=hp)
    sim = jnp.einsum("nqc,nlc->nql", q, key, precision=hp) * (float(C) ** -0.5)
    att = jax.nn.softmax(sim, axis=-1)
    ctx = jnp.einsum("nql,nlc->nqc", att, val, precision=hp)
    ctx = mm(ctx, params["wo"]) + params["bo"]
    out = mm(ctx, params["wbc"]) + mm(xh, params["wbh"]) + params["bb"]
    return jnp.transpose(out.reshape(N, Hh, Wh, Co), (0, 3, 1, 2))


if __name__ == "__main__":
    key = jax.random.PRNGKey(0)
    k_low, k_high, k_par = jax.random.split(key, 3)

    # Small shapes consistent with the module: low-level (key) feats are coarser.
    N, low_in, high_in, channels, out_channels = 2, 16, 32, 32, 32
    Hl = Wl = 8
    Hh = Wh = 16

    low_feats = jax.random.normal(k_low, (N, low_in, Hl, Wl), jnp.float32)
    high_feats = jax.random.normal(k_high, (N, high_in, Hh, Wh), jnp.float32)
    params = init_afnb_params(k_par, low_in, high_in, channels, out_channels)

    out = afnb_forward(low_feats, high_feats, params)
    out = jax.block_until_ready(out)
    assert out.shape == (N, out_channels, Hh, Wh)

    ref = afnb_reference(low_feats, high_feats, params)
    # bf16 matmul operands + bf16 output (f32 accumulation) -> combined
    # abs/rel tolerance against the f32 reference.
    err = float(jnp.max(jnp.abs(out.astype(jnp.float32) - ref) / (1.0 + jnp.abs(ref))))
    assert err < 5e-2, f"kernel mismatch vs reference: rel/abs err {err}"

    # TODO(synk): feed NHWC activations end-to-end (channels_last=True) in the
    # real pipeline to drop the wrapper-side NCHW<->NHWC HBM transposes.
    print("KERNEL_OK")
</pallas_src>

<mosaic_0001>
module attributes {stable_mosaic.version = 11 : i64} {
  func.func @_kv_kernel(%arg0: i32, %arg1: i32, %arg2: memref<1x64x16xbf16, #tpu.memory_space<vmem>>, %arg3: memref<128x64xf32, #tpu.memory_space<vmem>>, %arg4: memref<16x256xbf16, #tpu.memory_space<vmem>>, %arg5: memref<1x256xf32, #tpu.memory_space<vmem>>, %arg6: memref<1x128x128xbf16, #tpu.memory_space<vmem>>, %arg7: memref<1x128x128xbf16, #tpu.memory_space<vmem>>, %arg8: memref<128x256xf32, #tpu.memory_space<vmem>>) attributes {dimension_semantics = [#tpu.dimension_semantics<parallel>, #tpu.dimension_semantics<arbitrary>], iteration_bounds = array<i64: 2, 1>, scalar_prefetch = 0 : i64, scratch_operands = 1 : i64, tpu.core_type = #tpu.core_type<tc>, window_params = [{transform_indices = @transform_0, window_bounds = array<i64: 1, 64, 16>}, {transform_indices = @transform_1, window_bounds = array<i64: 128, 64>}, {pipeline_mode = #tpu.pipeline_mode<synchronous>, transform_indices = @transform_2, window_bounds = array<i64: 16, 256>}, {pipeline_mode = #tpu.pipeline_mode<synchronous>, transform_indices = @transform_3, window_bounds = array<i64: 1, 256>}, {transform_indices = @transform_4, window_bounds = array<i64: 1, 128, 128>}, {transform_indices = @transform_5, window_bounds = array<i64: 1, 128, 128>}]} {
    %c0_i32 = arith.constant 0 : i32
    %0 = arith.cmpi eq, %arg1, %c0_i32 : i32
    %1 = arith.extui %0 : i1 to i32
    %c0_i32_0 = arith.constant 0 : i32
    %2 = arith.cmpi ne, %1, %c0_i32_0 : i32
    scf.if %2 {
      %cst_17 = arith.constant 0.000000e+00 : f32
      %24 = vector.broadcast %cst_17 : f32 to vector<128x256xf32>
      %c0_18 = arith.constant 0 : index
      %c0_19 = arith.constant 0 : index
      %25 = vector.load %arg8[%c0_18, %c0_19] : memref<128x256xf32, #tpu.memory_space<vmem>>, vector<128x256xf32>
      tpu.vector_store %arg8[%c0_18, %c0_19], %24 {strides = array<i32>} : memref<128x256xf32, #tpu.memory_space<vmem>>, vector<128x256xf32>,
    } else {
    }
    %c0 = arith.constant 0 : index
    %c0_1 = arith.constant 0 : index
    %c0_2 = arith.constant 0 : index
    %3 = vector.load %arg2[%c0, %c0_1, %c0_2] : memref<1x64x16xbf16, #tpu.memory_space<vmem>>, vector<1x64x16xbf16>
    %4 = vector.shape_cast %3 : vector<1x64x16xbf16> to vector<64x16xbf16>
    %c0_3 = arith.constant 0 : index
    %c0_4 = arith.constant 0 : index
    %5 = vector.load %arg4[%c0_3, %c0_4] : memref<16x256xbf16, #tpu.memory_space<vmem>>, vector<16x256xbf16>
    %cst = arith.constant dense<0.000000e+00> : vector<64x256xf32>
    %6 = tpu.matmul %4, %5, %cst {dimension_numbers = #tpu.dot_dimension_numbers<[1], [0], [0], [1], [0, 0, 1, 1], [], []>} : vector<64x16xbf16>, vector<16x256xbf16>, vector<64x256xf32> -> vector<64x256xf32>
    %c0_5 = arith.constant 0 : index
    %c0_6 = arith.constant 0 : index
    %7 = vector.load %arg5[%c0_5, %c0_6] : memref<1x256xf32, #tpu.memory_space<vmem>>, vector<1x256xf32>
    %8 = vector.broadcast %7 : vector<1x256xf32> to vector<64x256xf32>
    %9 = arith.addf %6, %8 : vector<64x256xf32>
    %10 = tpu.iota {dimensions = array<i32: 1>} : vector<64x256xi32>
    %c128_i32 = arith.constant 128 : i32
    %11 = vector.broadcast %c128_i32 : i32 to vector<64x256xi32>
    %12 = arith.cmpi slt, %10, %11 : vector<64x256xi32>
    %cst_7 = arith.constant 0.000000e+00 : f32
    %13 = vector.broadcast %cst_7 : f32 to vector<64x256xf32>
    %14 = arith.maximumf %9, %13 : vector<64x256xf32>
    %15 = arith.select %12, %14, %9 : vector<64x256xi1>, vector<64x256xf32>
    %c0_8 = arith.constant 0 : index
    %c0_9 = arith.constant 0 : index
    %16 = vector.load %arg8[%c0_8, %c0_9] : memref<128x256xf32, #tpu.memory_space<vmem>>, vector<128x256xf32>
    %c0_10 = arith.constant 0 : index
    %c0_11 = arith.constant 0 : index
    %17 = vector.load %arg3[%c0_10, %c0_11] : memref<128x64xf32, #tpu.memory_space<vmem>>, vector<128x64xf32>
    %cst_12 = arith.constant dense<0.000000e+00> : vector<128x256xf32>
    %18 = tpu.matmul %17, %15, %cst_12 {dimension_numbers = #tpu.dot_dimension_numbers<[1], [0], [0], [1], [0, 0, 1, 1], [], []>} : vector<128x64xf32>, vector<64x256xf32>, vector<128x256xf32> -> vector<128x256xf32>
    %19 = arith.addf %16, %18 : vector<128x256xf32>
    %c0_13 = arith.constant 0 : index
    %c0_14 = arith.constant 0 : index
    %20 = vector.load %arg8[%c0_13, %c0_14] : memref<128x256xf32, #tpu.memory_space<vmem>>, vector<128x256xf32>
    tpu.vector_store %arg8[%c0_13, %c0_14], %19 {strides = array<i32>} : memref<128x256xf32, #tpu.memory_space<vmem>>, vector<128x256xf32>,
    %c0_i32_15 = arith.constant 0 : i32
    %21 = arith.cmpi eq, %arg1, %c0_i32_15 : i32
    %22 = arith.extui %21 : i1 to i32
    %c0_i32_16 = arith.constant 0 : i32
    %23 = arith.cmpi ne, %22, %c0_i32_16 : i32
    scf.if %23 {
      %c0_17 = arith.constant 0 : index
      %c0_18 = arith.constant 0 : index
      %24 = vector.load %arg8[%c0_17, %c0_18] : memref<128x256xf32, #tpu.memory_space<vmem>>, vector<128x256xf32>
      %25 = vector.extract_strided_slice %24 {offsets = [0, 0], sizes = [128, 128], strides = [1, 1]} : vector<128x256xf32> to vector<128x128xf32>
      %26 = tpu.transpose %25, [1, 0] : vector<128x128xf32> -> vector<128x128xf32>
      %27 = arith.truncf %26 : vector<128x128xf32> to vector<128x128xbf16>
      %c0_19 = arith.constant 0 : index
      %c0_20 = arith.constant 0 : index
      %c0_21 = arith.constant 0 : index
      %28 = vector.load %arg6[%c0_19, %c0_20, %c0_21] : memref<1x128x128xbf16, #tpu.memory_space<vmem>>, vector<1x128x128xbf16>
      %29 = vector.shape_cast %28 : vector<1x128x128xbf16> to vector<128x128xbf16>
      %30 = vector.shape_cast %27 : vector<128x128xbf16> to vector<1x128x128xbf16>
      tpu.vector_store %arg6[%c0_19, %c0_20, %c0_21], %30 {strides = array<i32>} : memref<1x128x128xbf16, #tpu.memory_space<vmem>>, vector<1x128x128xbf16>,
      %31 = vector.extract_strided_slice %24 {offsets = [0, 128], sizes = [128, 128], strides = [1, 1]} : vector<128x256xf32> to vector<128x128xf32>
      %32 = arith.truncf %31 : vector<128x128xf32> to vector<128x128xbf16>
      %c0_22 = arith.constant 0 : index
      %c0_23 = arith.constant 0 : index
      %c0_24 = arith.constant 0 : index
      %33 = vector.load %arg7[%c0_22, %c0_23, %c0_24] : memref<1x128x128xbf16, #tpu.memory_space<vmem>>, vector<1x128x128xbf16>
      %34 = vector.shape_cast %33 : vector<1x128x128xbf16> to vector<128x128xbf16>
      %35 = vector.shape_cast %32 : vector<128x128xbf16> to vector<1x128x128xbf16>
      tpu.vector_store %arg7[%c0_22, %c0_23, %c0_24], %35 {strides = array<i32>} : memref<1x128x128xbf16, #tpu.memory_space<vmem>>, vector<1x128x128xbf16>,
    } else {
    }
    return
  }
  func.func @transform_0(%arg0: i32, %arg1: i32) -> (i32, i32, i32) {
    %c0_i32 = arith.constant 0 : i32
    %c0_i32_0 = arith.constant 0 : i32
    return %arg0, %arg1, %c0_i32 : i32, i32, i32
  }
  func.func @transform_1(%arg0: i32, %arg1: i32) -> (i32, i32) {
    %c0_i32 = arith.constant 0 : i32
    %c0_i32_0 = arith.constant 0 : i32
    return %c0_i32, %arg1 : i32, i32
  }
  func.func @transform_2(%arg0: i32, %arg1: i32) -> (i32, i32) {
    %c0_i32 = arith.constant 0 : i32
    %c0_i32_0 = arith.constant 0 : i32
    %c0_i32_1 = arith.constant 0 : i32
    return %c0_i32, %c0_i32_0 : i32, i32
  }
  func.func @transform_3(%arg0: i32, %arg1: i32) -> (i32, i32) {
    %c0_i32 = arith.constant 0 : i32
    %c0_i32_0 = arith.constant 0 : i32
    %c0_i32_1 = arith.constant 0 : i32
    return %c0_i32, %c0_i32_0 : i32, i32
  }
  func.func @transform_4(%arg0: i32, %arg1: i32) -> (i32, i32, i32) {
    %c0_i32 = arith.constant 0 : i32
    %c0_i32_0 = arith.constant 0 : i32
    %c0_i32_1 = arith.constant 0 : i32
    return %arg0, %c0_i32, %c0_i32_0 : i32, i32, i32
  }
  func.func @transform_5(%arg0: i32, %arg1: i32) -> (i32, i32, i32) {
    %c0_i32 = arith.constant 0 : i32
    %c0_i32_0 = arith.constant 0 : i32
    %c0_i32_1 = arith.constant 0 : i32
    return %arg0, %c0_i32, %c0_i32_0 : i32, i32, i32
  }
}

</mosaic_0001>

<llo_original>
// kernel: tpu_custom_call.1
$region0: #{tpu_custom_call.1}
  #allocation0 [shape = 'u32[]', space=smem, size = 0x4, offset = 0x4, fixed_abs, tag = 'smem constant byte address 0x4 - core index']
  #allocation1 [shape = 'u32[144,128]{1,0:T(1,128)}', space=vmem, size = 0x12000, scoped, tag = 'internal scratch']
  #allocation2 [shape = 'f32[128,256]{1,0:T(8,128)}', space=vmem, size = 0x20000, scoped, tag = 'scratch operand']
  %s0 = inlined_call_operand.vmem [shape: bf16[2,64,16], index: 0, kind: input, shape index: {}]
  %s1 = inlined_call_operand.vmem [shape: f32[128,64], index: 1, kind: input, shape index: {}]
  %s2 = inlined_call_operand.vmem [shape: bf16[16,256], index: 2, kind: input, shape index: {}]
  %s3 = inlined_call_operand.vmem [shape: f32[1,256], index: 3, kind: input, shape index: {}]
  %s4 = inlined_call_operand.hbm [shape: bf16[2,128,128], index: 4, kind: output, shape index: {0}]
  %s5 = inlined_call_operand.hbm [shape: bf16[2,128,128], index: 5, kind: output, shape index: {1}]
  %6 = xla_tuple %s4, %s5
  %s7 = sld [smem:[#allocation0]]
  $region65: #{tpu_custom_call.1} parent=0
    _
  %s9 = ssub.s32 1, %s7
  %s10 = scalar_select 0, %s9, %s7
  $region1: #{tpu_custom_call.1} parent=0
    #allocation3 [shape = 'u8[65536]{0}', space=vmem, size = 0x10000, scoped, tag = 'output window, operand 0']
    #allocation4 [shape = 's32[2]{0}', space=sflag, size = 0x8, scoped, tag = 'scoped memory for tpu_custom_call.1']
    #allocation5 [shape = 'u8[65536]{0}', space=vmem, size = 0x10000, scoped, tag = 'output window, operand 1']
    #allocation6 [shape = 's32[2]{0}', space=sflag, size = 0x8, scoped, tag = 'scoped memory for tpu_custom_call.1']
    %11 = vsyncpa [#allocation4], 0
    %s12 = scalar_lea.sflag [#allocation4], 1
    %13 = vsyncpa %s12, 0
    %14 = vsyncpa [#allocation6], 0
    %s15 = scalar_lea.sflag [#allocation6], 1
    %16 = vsyncpa %s15, 0
    loop: start=0, step=1, limit=4
    $region2: #{tpu_custom_call.1} parent=1 // loop_pre_header
      _
    $region3: #{tpu_custom_call.1} parent=1 // loop_header
      %s18 = sphi 0, %s22
      %p19 = scmp.ge.s32.totalorder %s18, 4
      %s25 = sphi 0, %s37
      %s26 = sphi 0, %s33
      %s27 = sphi 0, %s25
      %s28 = sphi 0, %s26
      %s29 = sphi 0, %s27
      %s30 = sphi 0, %s28
      %s42 = sphi 0, %s44
      %s45 = sphi 0, %s42
      %s46 = sphi 0, %s45
      %s62 = sphi 0, %s46
      %s68 = sphi 0, %s70
      %s71 = sphi 0, %s68
      %s72 = sphi 0, %s71
      %s88 = sphi 0, %s72
      %s92 = sphi 0, %s92
      %s94 = sphi 0, %s92
      %s95 = sphi 0, %s94
      %s109 = sphi 0, %s95
      %s113 = sphi 0, %s113
      %s115 = sphi 0, %s113
      %s116 = sphi 0, %s115
      %s130 = sphi 0, %s116
      %s136 = sphi 0, %s138
      %s139 = sphi 0, %s136
      %s140 = sphi 0, %s139
      %s156 = sphi 0, %s140
      %s162 = sphi 0, %s164
      %s165 = sphi 0, %s162
      %s166 = sphi 0, %s165
      %s182 = sphi 0, %s166
    $region4: #{tpu_custom_call.1} parent=1 // loop_header_branch
      %21 = sbr.rel (%p19) target = $region8
    $region5: #{tpu_custom_call.1} parent=1 // loop_body
      %s23 = ssub.s32 %s18, 1
      %s24 = ssub.s32 %s18, 2
      %s31 = sadd.s32 1, %s26
      %p32 = scmp.ge.s32.totalorder %s31, 1
      %s33 = scalar_select %p32, 0, %s31
      %s34 = sadd.s32 1, %s25
      %s35 = scalar_select %p32, %s34, %s25
      %p36 = scmp.ge.s32.totalorder %s35, 2
      %s37 = scalar_select %p36, 0, %s35
      %s38 = ssub.s32 %s25, %s37
      %s39 = ssub.s32 %s26, %s33
      %s40 = sor.u32 %s38, %s39
      %p41 = scmp.eq.s32.totalorder %s40, 0
      %s43 = sadd.s32 %s42, 1
      %s44 = scalar_select %p41, %s42, %s43
      %p47 = pneg %p41
      %p48 = scmp.eq.s32.totalorder %s18, 1
      %p49 = por %p47, %p48
      %p50 = scmp.ne.s32.totalorder %s42, %s45
      %p51 = scmp.eq.s32.totalorder %s18, 0
      %p52 = por %p50, %p51
      %p53 = scmp.ne.s32.totalorder %s42, %s45
      %p54 = scmp.eq.s32.totalorder %s23, 1
      %p55 = por %p53, %p54
      %p56 = scmp.ne.s32.totalorder %s45, %s46
      %p57 = scmp.eq.s32.totalorder %s23, 0
      %p58 = por %p56, %p57
      %p59 = scmp.ne.s32.totalorder %s45, %s46
      %p60 = scmp.eq.s32.totalorder %s24, 1
      %p61 = por %p59, %p60
      %p63 = scmp.ne.s32.totalorder %s46, %s62
      %p64 = scmp.eq.s32.totalorder %s24, 0
      %p65 = por %p63, %p64
      %s66 = ssub.s32 %s26, %s33
      %p67 = scmp.eq.s32.totalorder %s66, 0
      %s69 = sadd.s32 %s68, 1
      %s70 = scalar_select %p67, %s68, %s69
      %p73 = pneg %p67
      %p74 = scmp.eq.s32.totalorder %s18, 1
      %p75 = por %p73, %p74
      %p76 = scmp.ne.s32.totalorder %s68, %s71
      %p77 = scmp.eq.s32.totalorder %s18, 0
      %p78 = por %p76, %p77
      %p79 = scmp.ne.s32.totalorder %s68, %s71
      %p80 = scmp.eq.s32.totalorder %s23, 1
      %p81 = por %p79, %p80
      %p82 = scmp.ne.s32.totalorder %s71, %s72
      %p83 = scmp.eq.s32.totalorder %s23, 0
      %p84 = por %p82, %p83
      %p85 = scmp.ne.s32.totalorder %s71, %s72
      %p86 = scmp.eq.s32.totalorder %s24, 1
      %p87 = por %p85, %p86
      %p89 = scmp.ne.s32.totalorder %s72, %s88
      %p90 = scmp.eq.s32.totalorder %s24, 0
      %p91 = por %p89, %p90
      %s93 = sadd.s32 %s92, 1
      %p96 = scmp.eq.s32.totalorder %s18, 1
      %p97 = scmp.ne.s32.totalorder %s92, %s94
      %p98 = scmp.eq.s32.totalorder %s18, 0
      %p99 = por %p97, %p98
      %p100 = scmp.ne.s32.totalorder %s92, %s94
      %p101 = scmp.eq.s32.totalorder %s23, 1
      %p102 = por %p100, %p101
      %p103 = scmp.ne.s32.totalorder %s94, %s95
      %p104 = scmp.eq.s32.totalorder %s23, 0
      %p105 = por %p103, %p104
      %p106 = scmp.ne.s32.totalorder %s94, %s95
      %p107 = scmp.eq.s32.totalorder %s24, 1
      %p108 = por %p106, %p107
      %p110 = scmp.ne.s32.totalorder %s95, %s109
      %p111 = scmp.eq.s32.totalorder %s24, 0
      %p112 = por %p110, %p111
      %s114 = sadd.s32 %s113, 1
      %p117 = scmp.eq.s32.totalorder %s18, 1
      %p118 = scmp.ne.s32.totalorder %s113, %s115
      %p119 = scmp.eq.s32.totalorder %s18, 0
      %p120 = por %p118, %p119
      %p121 = scmp.ne.s32.totalorder %s113, %s115
      %p122 = scmp.eq.s32.totalorder %s23, 1
      %p123 = por %p121, %p122
      %p124 = scmp.ne.s32.totalorder %s115, %s116
      %p125 = scmp.eq.s32.totalorder %s23, 0
      %p126 = por %p124, %p125
      %p127 = scmp.ne.s32.totalorder %s115, %s116
      %p128 = scmp.eq.s32.totalorder %s24, 1
      %p129 = por %p127, %p128
      %p131 = scmp.ne.s32.totalorder %s116, %s130
      %p132 = scmp.eq.s32.totalorder %s24, 0
      %p133 = por %p131, %p132
      %s134 = ssub.s32 %s25, %s37
      %p135 = scmp.eq.s32.totalorder %s134, 0
      %s137 = sadd.s32 %s136, 1
      %s138 = scalar_select %p135, %s136, %s137
      %p141 = pneg %p135
      %p142 = scmp.eq.s32.totalorder %s18, 1
      %p143 = por %p141, %p142
      %p144 = scmp.ne.s32.totalorder %s136, %s139
      %p145 = scmp.eq.s32.totalorder %s18, 0
      %p146 = por %p144, %p145
      %p147 = scmp.ne.s32.totalorder %s136, %s139
      %p148 = scmp.eq.s32.totalorder %s23, 1
      %p149 = por %p147, %p148
      %p150 = scmp.ne.s32.totalorder %s139, %s140
      %p151 = scmp.eq.s32.totalorder %s23, 0
      %p152 = por %p150, %p151
      %p153 = scmp.ne.s32.totalorder %s139, %s140
      %p154 = scmp.eq.s32.totalorder %s24, 1
      %p155 = por %p153, %p154
      %p157 = scmp.ne.s32.totalorder %s140, %s156
      %p158 = scmp.eq.s32.totalorder %s24, 0
      %p159 = por %p157, %p158
      %s160 = ssub.s32 %s25, %s37
      %p161 = scmp.eq.s32.totalorder %s160, 0
      %s163 = sadd.s32 %s162, 1
      %s164 = scalar_select %p161, %s162, %s163
      %p167 = pneg %p161
      %p168 = scmp.eq.s32.totalorder %s18, 1
      %p169 = por %p167, %p168
      %p170 = scmp.ne.s32.totalorder %s162, %s165
      %p171 = scmp.eq.s32.totalorder %s18, 0
      %p172 = por %p170, %p171
      %p173 = scmp.ne.s32.totalorder %s162, %s165
      %p174 = scmp.eq.s32.totalorder %s23, 1
      %p175 = por %p173, %p174
      %p176 = scmp.ne.s32.totalorder %s165, %s166
      %p177 = scmp.eq.s32.totalorder %s23, 0
      %p178 = por %p176, %p177
      %p179 = scmp.ne.s32.totalorder %s165, %s166
      %p180 = scmp.eq.s32.totalorder %s24, 1
      %p181 = por %p179, %p180
      %p183 = scmp.ne.s32.totalorder %s166, %s182
      %p184 = scmp.eq.s32.totalorder %s24, 0
      %p185 = por %p183, %p184
      %p186 = scmp.le.s32.totalorder 1, %s18
      %p187 = scmp.lt.s32.totalorder %s18, 3
      %p188 = pnand %p186, %p187
      %p189 = pneg %p188
      // Predicated region
      $region9: #{tpu_custom_call.1} parent=5 // pred_check
        _
      $region10: #{tpu_custom_call.1} parent=5 // pred_check_branch
        %191 = sbr.rel (%p188) target = $region12
      $region11: #{tpu_custom_call.1} parent=5 // pred_region
        %s192 = ssub.s32 %s18, 1
        // Predicated region
        $region13: #{tpu_custom_call.1} parent=11 // pred_check
          %p193 = pneg %p84
        $region14: #{tpu_custom_call.1} parent=11 // pred_check_branch
          %195 = sbr.rel (%p193) target = $region16
        $region15: #{tpu_custom_call.1} parent=11 // pred_region
          %p196 = scmp.lt.s32.totalorder %s28, 0
          %s197 = scalar_select %p196, %s28, 0
          %s198 = smul.addr %s197, 8
          %s199 = scalar_lea.vmem %s1, %s198
        $region16: #{tpu_custom_call.1} parent=11 // pred_fallthru
          _
        // Predicated region
        $region17: #{tpu_custom_call.1} parent=11 // pred_check
          %p200 = pneg %p105
        $region18: #{tpu_custom_call.1} parent=11 // pred_check_branch
          %202 = sbr.rel (%p200) target = $region20
        $region19: #{tpu_custom_call.1} parent=11 // pred_region
          _
        $region20: #{tpu_custom_call.1} parent=11 // pred_fallthru
          _
        // Predicated region
        $region21: #{tpu_custom_call.1} parent=11 // pred_check
          %p203 = pneg %p126
        $region22: #{tpu_custom_call.1} parent=11 // pred_check_branch
          %205 = sbr.rel (%p203) target = $region24
        $region23: #{tpu_custom_call.1} parent=11 // pred_region
          _
        $region24: #{tpu_custom_call.1} parent=11 // pred_fallthru
          _
      $region12: #{tpu_custom_call.1} parent=5 // pred_fallthru
        _
      %p206 = scmp.lt.s32.totalorder %s18, 2
      // Predicated region
      $region25: #{tpu_custom_call.1} parent=5 // pred_check
        %p207 = pneg %p206
      $region26: #{tpu_custom_call.1} parent=5 // pred_check_branch
        %209 = sbr.rel (%p207) target = $region28
      $region27: #{tpu_custom_call.1} parent=5 // pred_region
        // Predicated region
        $region29: #{tpu_custom_call.1} parent=27 // pred_check
          %p210 = pneg %p52
        $region30: #{tpu_custom_call.1} parent=27 // pred_check_branch
          %212 = sbr.rel (%p210) target = $region32
        $region31: #{tpu_custom_call.1} parent=27 // pred_region
          %s213 = smul.u32 8, %s26
          %p214 = scmp.lt.s32.totalorder %s25, 1
          %s215 = scalar_select %p214, %s25, 1
          %p216 = scmp.lt.s32.totalorder %s213, 7
          %s217 = scalar_select %p216, %s213, 7
          %s218 = smul.addr %s215, 8
          %s219 = sadd.s32 %s217, %s218
          %s220 = smul.addr %s219, 4
          %s221 = scalar_lea.vmem %s0, %s220
          %s222 = smul.u32 8, %s26
        $region32: #{tpu_custom_call.1} parent=27 // pred_fallthru
          _
      $region28: #{tpu_custom_call.1} parent=5 // pred_fallthru
        _
      %p223 = scmp.le.s32.totalorder 1, %s18
      %p224 = scmp.lt.s32.totalorder %s18, 3
      %p225 = pnand %p223, %p224
      %p226 = pneg %p225
      // Predicated region
      $region33: #{tpu_custom_call.1} parent=5 // pred_check
        _
      $region34: #{tpu_custom_call.1} parent=5 // pred_check_branch
        %228 = sbr.rel (%p225) target = $region36
      $region35: #{tpu_custom_call.1} parent=5 // pred_region
        %s229 = ssub.s32 %s18, 1
        %s230 = smul.u32 8, %s28
        %p231 = scmp.lt.s32.totalorder %s27, 1
        %s232 = scalar_select %p231, %s27, 1
        %p233 = scmp.lt.s32.totalorder %s230, 7
        %s234 = scalar_select %p233, %s230, 7
        %s235 = smul.addr %s232, 8
        %s236 = sadd.s32 %s234, %s235
        %s237 = smul.addr %s236, 4
        %s238 = scalar_lea.vmem %s0, %s237
        %p239 = pneg %p58
        %p240 = pneg %p55
        %p241 = scmp.lt.s32.totalorder %s28, 0
        %s242 = scalar_select %p241, %s28, 0
        %s243 = smul.addr %s242, 8
        %s244 = scalar_lea.vmem %s1, %s243
        %p245 = pneg %p84
        %p246 = pneg %p81
        %p247 = pneg %p105
        %p248 = pneg %p102
        %p249 = pneg %p126
        %p250 = pneg %p123
        %p251 = pneg %p152
        %p252 = pneg %p149
        %s253 = sand.u32 %s139, 1
        %s254 = scalar_lea.sflag [#allocation4], %s253
        %s255 = sand.u32 %s139, 1
        %s256 = smul.addr %s255, 64
        %s257 = scalar_lea.vmem [#allocation3], %s256
        %p258 = pneg %p178
        %p259 = pneg %p175
        %s260 = sand.u32 %s165, 1
        %s261 = scalar_lea.sflag [#allocation6], %s260
        %s262 = sand.u32 %s165, 1
        %s263 = smul.addr %s262, 64
        %s264 = scalar_lea.vmem [#allocation5], %s263
        %s265 = smul.u32 8, %s28
        %p266 = scmp.lt.s32.totalorder %s27, 1
        %s267 = scalar_select %p266, %s27, 1
        %p268 = scmp.lt.s32.totalorder %s265, 7
        %s269 = scalar_select %p268, %s265, 7
        %s270 = smul.addr %s267, 8
        %s271 = sadd.s32 %s269, %s270
        %s272 = smul.addr %s271, 4
        %s273 = scalar_lea.vmem %s0, %s272
        %s274 = smul.u32 8, %s28
        %p275 = scmp.lt.s32.totalorder %s28, 0
        %s276 = scalar_select %p275, %s28, 0
        %s277 = smul.addr %s276, 8
        %s278 = scalar_lea.vmem %s1, %s277
        %p280 = scmp.eq.s32.totalorder %s28, 0
        // Predicated region
        $region37: #{tpu_custom_call.1} parent=35 // pred_check
          %p281 = pneg %p280
        $region38: #{tpu_custom_call.1} parent=35 // pred_check_branch
          %283 = sbr.rel (%p281) target = $region40
        $region39: #{tpu_custom_call.1} parent=35 // pred_region
          %284 = vst [vmem:[#allocation2] sm:$0xff] 0.0
          %285 = vst [vmem:[#allocation2 + $0x8] sm:$0xff] 0.0
          %286 = vst [vmem:[#allocation2 + $0x10] sm:$0xff] 0.0
          %287 = vst [vmem:[#allocation2 + $0x18] sm:$0xff] 0.0
          %288 = vst [vmem:[#allocation2 + $0x20] sm:$0xff] 0.0
          %289 = vst [vmem:[#allocation2 + $0x28] sm:$0xff] 0.0
          %290 = vst [vmem:[#allocation2 + $0x30] sm:$0xff] 0.0
          %291 = vst [vmem:[#allocation2 + $0x38] sm:$0xff] 0.0
          %292 = vst [vmem:[#allocation2 + $0x40] sm:$0xff] 0.0
          %293 = vst [vmem:[#allocation2 + $0x48] sm:$0xff] 0.0
          %294 = vst [vmem:[#allocation2 + $0x50] sm:$0xff] 0.0
          %295 = vst [vmem:[#allocation2 + $0x58] sm:$0xff] 0.0
          %296 = vst [vmem:[#allocation2 + $0x60] sm:$0xff] 0.0
          %297 = vst [vmem:[#allocation2 + $0x68] sm:$0xff] 0.0
          %298 = vst [vmem:[#allocation2 + $0x70] sm:$0xff] 0.0
          %299 = vst [vmem:[#allocation2 + $0x78] sm:$0xff] 0.0
          %300 = vst [vmem:[#allocation2 + $0x80] sm:$0xff] 0.0
          %301 = vst [vmem:[#allocation2 + $0x88] sm:$0xff] 0.0
          %302 = vst [vmem:[#allocation2 + $0x90] sm:$0xff] 0.0
          %303 = vst [vmem:[#allocation2 + $0x98] sm:$0xff] 0.0
          %304 = vst [vmem:[#allocation2 + $0xa0] sm:$0xff] 0.0
          %305 = vst [vmem:[#allocation2 + $0xa8] sm:$0xff] 0.0
          %306 = vst [vmem:[#allocation2 + $0xb0] sm:$0xff] 0.0
          %307 = vst [vmem:[#allocation2 + $0xb8] sm:$0xff] 0.0
          %308 = vst [vmem:[#allocation2 + $0xc0] sm:$0xff] 0.0
          %309 = vst [vmem:[#allocation2 + $0xc8] sm:$0xff] 0.0
          %310 = vst [vmem:[#allocation2 + $0xd0] sm:$0xff] 0.0
          %311 = vst [vmem:[#allocation2 + $0xd8] sm:$0xff] 0.0
          %312 = vst [vmem:[#allocation2 + $0xe0] sm:$0xff] 0.0
          %313 = vst [vmem:[#allocation2 + $0xe8] sm:$0xff] 0.0
          %314 = vst [vmem:[#allocation2 + $0xf0] sm:$0xff] 0.0
          %315 = vst [vmem:[#allocation2 + $0xf8] sm:$0xff] 0.0
        $region40: #{tpu_custom_call.1} parent=35 // pred_fallthru
          _
        %v316 = vld [vmem:[%s273] sm:$0xf]
        %v317 = vld [vmem:[%s273 + $0x4] sm:$0xf]
        %v318 = vld [vmem:[%s273 + $0x8] sm:$0xf]
        %v319 = vld [vmem:[%s273 + $0xc] sm:$0xf]
        %v320 = vld [vmem:[%s273 + $0x10] sm:$0xf]
        %v321 = vld [vmem:[%s273 + $0x14] sm:$0xf]
        %v322 = vld [vmem:[%s273 + $0x18] sm:$0xf]
        %v323 = vld [vmem:[%s273 + $0x1c] sm:$0xf]
        %v324 = vld [vmem:[%s2] sm:$0xff]
        %v325 = vld [vmem:[%s2 + $0x8] sm:$0xff]
        %v326 = vld [vmem:[%s3] sm:$0x3]
        %v328 = vlaneseq
        %v329 = vshrl.u32 %v328, 7
        %v330 = vsub.s32 0, %v329
        %v331 = vrot.slane %v326, %v330
        %v332 = vlaneseq
        %v333 = vshrl.u32 %v332, 7
        %v334 = vsub.s32 1, %v333
        %v335 = vrot.slane %v326, %v334
        %v346 = vunpack.c.l.b16 %v316
        %v347 = vunpack.c.l.b16 %v317
        %v348 = vunpack.c.l.b16 %v318
        %v349 = vunpack.c.l.b16 %v319
        %v350 = vunpack.c.l.b16 %v320
        %v351 = vunpack.c.l.b16 %v321
        %v352 = vunpack.c.l.b16 %v322
        %v353 = vunpack.c.l.b16 %v323
        %v354 = vpack.c.b16 %v347, %v346
        %v355 = vpack.c.b16 %v349, %v348
        %v356 = vpack.c.b16 %v351, %v350
        %v357 = vpack.c.b16 %v353, %v352
        %v360 = vunpack.c.l.b16 %v324
        %v361 = vunpack.c.h.b16 %v324
        %v362 = vunpack.c.l.b16 %v325
        %v363 = vunpack.c.h.b16 %v325
        %v364 = vpack.c.b16 %v362, %v360
        %v365 = vpack.c.b16 %v363, %v361
        %vm368 = vcmask 130048
        %v370 = vsel %vm368, %v354, 0
        %v373 = vsel %vm368, %v355, 0
        %v376 = vsel %vm368, %v356, 0
        %v379 = vsel %vm368, %v357, 0
        %381 = vmatprep.subr.bf16.mxu0 0
        %382 = vmatpush1.bf16.msra.mxu0 0
        %383 = vmatprep.subr.bf16.mxu0 0
        %384 = vmatpush1.bf16.msra.mxu0 0
        %385 = vmatprep.subr.bf16.mxu0 0
        %386 = vmatpush1.bf16.msra.mxu0 0
        %387 = vmatprep.subr.bf16.mxu0 0
        %388 = vmatpush1.bf16.msra.mxu0 0
        %389 = vmatprep.subr.bf16.mxu0 0
        %390 = vmatpush1.bf16.msra.mxu0 0
        %391 = vmatprep.subr.bf16.mxu0 0
        %392 = vmatpush1.bf16.msra.mxu0 0
        %393 = vmatprep.subr.bf16.mxu0 0
        %394 = vmatpush1.bf16.msra.mxu0 0
        %395 = vmatprep.subr.bf16.mxu0 %v365
        %396 = vmatpush1.bf16.msra.mxu0 %v364
        %397 = vmatprep.subr.bf16.mxu0 0
        %398 = vmatpush2.bf16.msra.mxu0 0
        %399 = vmatprep.subr.bf16.mxu0 0
        %400 = vmatpush2.bf16.msra.mxu0 0
        %401 = vmatprep.subr.bf16.mxu0 0
        %402 = vmatpush2.bf16.msra.mxu0 0
        %403 = vmatprep.subr.bf16.mxu0 0
        %404 = vmatpush2.bf16.msra.mxu0 0
        %405 = vmatprep.subr.bf16.mxu0 0
        %406 = vmatpush2.bf16.msra.mxu0 0
        %407 = vmatprep.subr.bf16.mxu0 0
        %408 = vmatpush2.bf16.msra.mxu0 0
        %409 = vmatprep.subr.bf16.mxu0 0
        %410 = vmatpush2.bf16.msra.mxu0 0
        %411 = vmatprep.subr.bf16.mxu0 0
        %412 = vmatpush2.bf16.msra.mxu0 0
        %413 = vmatprep.mubr.bf16.mxu0 0
        %414 = vmatmul.mubr.bf16.gmra.mxu0 %v370
        %v415 = vpop.f32.mrf.mxu0
        %v416 = vadd.f32 %v331, %v415
        %v417 = vpop.f32.mrf.mxu0
        %v418 = vadd.f32 %v335, %v417
        %v419 = vpop.f32.mrf.mxu0
        %v420 = vadd.f32 %v331, %v419
        %v421 = vpop.f32.mrf.mxu0
        %v422 = vadd.f32 %v335, %v421
        %423 = vmatprep.mubr.bf16.mxu0 0
        %424 = vmatmul.mubr.bf16.gmra.mxu0 %v373
        %v425 = vpop.f32.mrf.mxu0
        %v426 = vadd.f32 %v331, %v425
        %v427 = vpop.f32.mrf.mxu0
        %v428 = vadd.f32 %v335, %v427
        %v429 = vpop.f32.mrf.mxu0
        %v430 = vadd.f32 %v331, %v429
        %v431 = vpop.f32.mrf.mxu0
        %v432 = vadd.f32 %v335, %v431
        %433 = vmatprep.mubr.bf16.mxu0 0
        %434 = vmatmul.mubr.bf16.gmra.mxu0 %v376
        %v435 = vpop.f32.mrf.mxu0
        %v436 = vadd.f32 %v331, %v435
        %v437 = vpop.f32.mrf.mxu0
        %v438 = vadd.f32 %v335, %v437
        %v439 = vpop.f32.mrf.mxu0
        %v440 = vadd.f32 %v331, %v439
        %v441 = vpop.f32.mrf.mxu0
        %v442 = vadd.f32 %v335, %v441
        %443 = vmatprep.mubr.bf16.mxu0 0
        %444 = vmatmul.mubr.bf16.gmra.mxu0 %v379
        %v445 = vpop.f32.mrf.mxu0
        %v446 = vadd.f32 %v331, %v445
        %v447 = vpop.f32.mrf.mxu0
        %v448 = vadd.f32 %v335, %v447
        %v449 = vpop.f32.mrf.mxu0
        %v450 = vadd.f32 %v331, %v449
        %v451 = vpop.f32.mrf.mxu0
        %v452 = vadd.f32 %v335, %v451
        %453 = vdwg.mxu0
        %v454 = vlaneseq
        %v455 = vand.u32 %v454, 127
        %v456 = vadd.s32 %v455, 128
        %vm457 = vcmp.lt.s32.totalorder %v455, 128
        %vm458 = vcmp.lt.s32.totalorder %v456, 128
        %v459 = vmax.f32 %v416, 0.0
        %v460 = vmax.f32 %v418, 0.0
        %v461 = vmax.f32 %v420, 0.0
        %v462 = vmax.f32 %v422, 0.0
        %v463 = vmax.f32 %v426, 0.0
        %v464 = vmax.f32 %v428, 0.0
        %v465 = vmax.f32 %v430, 0.0
        %v466 = vmax.f32 %v432, 0.0
        %v467 = vmax.f32 %v436, 0.0
        %v468 = vmax.f32 %v438, 0.0
        %v469 = vmax.f32 %v440, 0.0
        %v470 = vmax.f32 %v442, 0.0
        %v471 = vmax.f32 %v446, 0.0
        %v472 = vmax.f32 %v448, 0.0
        %v473 = vmax.f32 %v450, 0.0
        %v474 = vmax.f32 %v452, 0.0
        %v475 = vsel %vm457, %v459, %v416
        %v476 = vsel %vm458, %v460, %v418
        %v477 = vsel %vm457, %v461, %v420
        %v478 = vsel %vm458, %v462, %v422
        %v479 = vsel %vm457, %v463, %v426
        %v480 = vsel %vm458, %v464, %v428
        %v481 = vsel %vm457, %v465, %v430
        %v482 = vsel %vm458, %v466, %v432
        %v483 = vsel %vm457, %v467, %v436
        %v484 = vsel %vm458, %v468, %v438
        %v485 = vsel %vm457, %v469, %v440
        %v486 = vsel %vm458, %v470, %v442
        %v487 = vsel %vm457, %v471, %v446
        %v488 = vsel %vm458, %v472, %v448
        %v489 = vsel %vm457, %v473, %v450
        %v490 = vsel %vm458, %v474, %v452
        %v491 = vld [vmem:[#allocation2] sm:$0xff]
        %v492 = vld [vmem:[#allocation2 + $0x8] sm:$0xff]
        %v493 = vld [vmem:[#allocation2 + $0x10] sm:$0xff]
        %v494 = vld [vmem:[#allocation2 + $0x18] sm:$0xff]
        %v495 = vld [vmem:[#allocation2 + $0x20] sm:$0xff]
        %v496 = vld [vmem:[#allocation2 + $0x28] sm:$0xff]
        %v497 = vld [vmem:[#allocation2 + $0x30] sm:$0xff]
        %v498 = vld [vmem:[#allocation2 + $0x38] sm:$0xff]
        %v499 = vld [vmem:[#allocation2 + $0x40] sm:$0xff]
        %v500 = vld [vmem:[#allocation2 + $0x48] sm:$0xff]
        %v501 = vld [vmem:[#allocation2 + $0x50] sm:$0xff]
        %v502 = vld [vmem:[#allocation2 + $0x58] sm:$0xff]
        %v503 = vld [vmem:[#allocation2 + $0x60] sm:$0xff]
        %v504 = vld [vmem:[#allocation2 + $0x68] sm:$0xff]
        %v505 = vld [vmem:[#allocation2 + $0x70] sm:$0xff]
        %v506 = vld [vmem:[#allocation2 + $0x78] sm:$0xff]
        %v507 = vld [vmem:[#allocation2 + $0x80] sm:$0xff]
        %v508 = vld [vmem:[#allocation2 + $0x88] sm:$0xff]
        %v509 = vld [vmem:[#allocation2 + $0x90] sm:$0xff]
        %v510 = vld [vmem:[#allocation2 + $0x98] sm:$0xff]
        %v511 = vld [vmem:[#allocation2 + $0xa0] sm:$0xff]
        %v512 = vld [vmem:[#allocation2 + $0xa8] sm:$0xff]
        %v513 = vld [vmem:[#allocation2 + $0xb0] sm:$0xff]
        %v514 = vld [vmem:[#allocation2 + $0xb8] sm:$0xff]
        %v515 = vld [vmem:[#allocation2 + $0xc0] sm:$0xff]
        %v516 = vld [vmem:[#allocation2 + $0xc8] sm:$0xff]
        %v517 = vld [vmem:[#allocation2 + $0xd0] sm:$0xff]
        %v518 = vld [vmem:[#allocation2 + $0xd8] sm:$0xff]
        %v519 = vld [vmem:[#allocation2 + $0xe0] sm:$0xff]
        %v520 = vld [vmem:[#allocation2 + $0xe8] sm:$0xff]
        %v521 = vld [vmem:[#allocation2 + $0xf0] sm:$0xff]
        %v522 = vld [vmem:[#allocation2 + $0xf8] sm:$0xff]
        %v523 = vld [vmem:[%s278] sm:$0xff]
        %v524 = vld [vmem:[%s278 + $0x8] sm:$0xff]
        %v525 = vld [vmem:[%s278 + $0x10] sm:$0xff]
        %v526 = vld [vmem:[%s278 + $0x18] sm:$0xff]
        %v527 = vld [vmem:[%s278 + $0x20] sm:$0xff]
        %v528 = vld [vmem:[%s278 + $0x28] sm:$0xff]
        %v529 = vld [vmem:[%s278 + $0x30] sm:$0xff]
        %v530 = vld [vmem:[%s278 + $0x38] sm:$0xff]
        %v531 = vld [vmem:[%s278 + $0x40] sm:$0xff]
        %v532 = vld [vmem:[%s278 + $0x48] sm:$0xff]
        %v533 = vld [vmem:[%s278 + $0x50] sm:$0xff]
        %v534 = vld [vmem:[%s278 + $0x58] sm:$0xff]
        %v535 = vld [vmem:[%s278 + $0x60] sm:$0xff]
        %v536 = vld [vmem:[%s278 + $0x68] sm:$0xff]
        %v537 = vld [vmem:[%s278 + $0x70] sm:$0xff]
        %v538 = vld [vmem:[%s278 + $0x78] sm:$0xff]
        %vm539 = vcmask 523264
        %v541 = vsel %vm539, %v523, 0
        %v544 = vsel %vm539, %v524, 0
        %v547 = vsel %vm539, %v525, 0
        %v550 = vsel %vm539, %v526, 0
        %v553 = vsel %vm539, %v527, 0
        %v556 = vsel %vm539, %v528, 0
        %v559 = vsel %vm539, %v529, 0
        %v562 = vsel %vm539, %v530, 0
        %v565 = vsel %vm539, %v531, 0
        %v568 = vsel %vm539, %v532, 0
        %v571 = vsel %vm539, %v533, 0
        %v574 = vsel %vm539, %v534, 0
        %v577 = vsel %vm539, %v535, 0
        %v580 = vsel %vm539, %v536, 0
        %v583 = vsel %vm539, %v537, 0
        %v586 = vsel %vm539, %v538, 0
        %588 = vmatprep.subr.mxu0 0.0
        %589 = vmatpush1.msra.mxu0 0.0
        %590 = vmatprep.subr.mxu0 0.0
        %591 = vmatpush1.msra.mxu0 0.0
        %592 = vmatprep.subr.mxu0 0.0
        %593 = vmatpush1.msra.mxu0 0.0
        %594 = vmatprep.subr.mxu0 0.0
        %595 = vmatpush1.msra.mxu0 0.0
        %596 = vmatprep.subr.mxu0 0.0
        %597 = vmatpush1.msra.mxu0 0.0
        %598 = vmatprep.subr.mxu0 0.0
        %599 = vmatpush1.msra.mxu0 0.0
        %600 = vmatprep.subr.mxu0 0.0
        %601 = vmatpush1.msra.mxu0 0.0
        %602 = vmatprep.subr.mxu0 0.0
        %603 = vmatpush1.msra.mxu0 0.0
        %604 = vmatprep.subr.mxu0 %v490
        %605 = vmatpush1.msra.mxu0 %v489
        %606 = vmatprep.subr.mxu0 %v488
        %607 = vmatpush1.msra.mxu0 %v487
        %608 = vmatprep.subr.mxu0 %v486
        %609 = vmatpush1.msra.mxu0 %v485
        %610 = vmatprep.subr.mxu0 %v484
        %611 = vmatpush1.msra.mxu0 %v483
        %612 = vmatprep.subr.mxu0 %v482
        %613 = vmatpush1.msra.mxu0 %v481
        %614 = vmatprep.subr.mxu0 %v480
        %615 = vmatpush1.msra.mxu0 %v479
        %616 = vmatprep.subr.mxu0 %v478
        %617 = vmatpush1.msra.mxu0 %v477
        %618 = vmatprep.subr.mxu0 %v476
        %619 = vmatpush1.msra.mxu0 %v475
        %620 = vmatprep.subr.mxu0 0.0
        %621 = vmatpush2.msra.mxu0 0.0
        %622 = vmatprep.subr.mxu0 0.0
        %623 = vmatpush2.msra.mxu0 0.0
        %624 = vmatprep.subr.mxu0 0.0
        %625 = vmatpush2.msra.mxu0 0.0
        %626 = vmatprep.subr.mxu0 0.0
        %627 = vmatpush2.msra.mxu0 0.0
        %628 = vmatprep.subr.mxu0 0.0
        %629 = vmatpush2.msra.mxu0 0.0
        %630 = vmatprep.subr.mxu0 0.0
        %631 = vmatpush2.msra.mxu0 0.0
        %632 = vmatprep.subr.mxu0 0.0
        %633 = vmatpush2.msra.mxu0 0.0
        %634 = vmatprep.subr.mxu0 0.0
        %635 = vmatpush2.msra.mxu0 0.0
        %636 = vmatprep.subr.mxu0 0.0
        %637 = vmatpush2.msra.mxu0 0.0
        %638 = vmatprep.subr.mxu0 0.0
        %639 = vmatpush2.msra.mxu0 0.0
        %640 = vmatprep.subr.mxu0 0.0
        %641 = vmatpush2.msra.mxu0 0.0
        %642 = vmatprep.subr.mxu0 0.0
        %643 = vmatpush2.msra.mxu0 0.0
        %644 = vmatprep.subr.mxu0 0.0
        %645 = vmatpush2.msra.mxu0 0.0
        %646 = vmatprep.subr.mxu0 0.0
        %647 = vmatpush2.msra.mxu0 0.0
        %648 = vmatprep.subr.mxu0 0.0
        %649 = vmatpush2.msra.mxu0 0.0
        %650 = vmatprep.subr.mxu0 0.0
        %651 = vmatpush2.msra.mxu0 0.0
        %652 = vmatprep.mubr.f32.mxu0 0.0
        %653 = vmatmul.mubr.f32.gmra.mxu0 %v541
        %v654 = vpop.f32.mrf.mxu0
        %v655 = vadd.f32 0.0, %v654
        %v656 = vpop.f32.mrf.mxu0
        %v657 = vadd.f32 0.0, %v656
        %658 = vmatprep.mubr.f32.mxu0 0.0
        %659 = vmatmul.mubr.f32.gmra.mxu0 %v544
        %v660 = vpop.f32.mrf.mxu0
        %v661 = vadd.f32 0.0, %v660
        %v662 = vpop.f32.mrf.mxu0
        %v663 = vadd.f32 0.0, %v662
        %664 = vmatprep.mubr.f32.mxu0 0.0
        %665 = vmatmul.mubr.f32.gmra.mxu0 %v547
        %v666 = vpop.f32.mrf.mxu0
        %v667 = vadd.f32 0.0, %v666
        %v668 = vpop.f32.mrf.mxu0
        %v669 = vadd.f32 0.0, %v668
        %670 = vmatprep.mubr.f32.mxu0 0.0
        %671 = vmatmul.mubr.f32.gmra.mxu0 %v550
        %v672 = vpop.f32.mrf.mxu0
        %v673 = vadd.f32 0.0, %v672
        %v674 = vpop.f32.mrf.mxu0
        %v675 = vadd.f32 0.0, %v674
        %676 = vmatprep.mubr.f32.mxu0 0.0
        %677 = vmatmul.mubr.f32.gmra.mxu0 %v553
        %v678 = vpop.f32.mrf.mxu0
        %v679 = vadd.f32 0.0, %v678
        %v680 = vpop.f32.mrf.mxu0
        %v681 = vadd.f32 0.0, %v680
        %682 = vmatprep.mubr.f32.mxu0 0.0
        %683 = vmatmul.mubr.f32.gmra.mxu0 %v556
        %v684 = vpop.f32.mrf.mxu0
        %v685 = vadd.f32 0.0, %v684
        %v686 = vpop.f32.mrf.mxu0
        %v687 = vadd.f32 0.0, %v686
        %688 = vmatprep.mubr.f32.mxu0 0.0
        %689 = vmatmul.mubr.f32.gmra.mxu0 %v559
        %v690 = vpop.f32.mrf.mxu0
        %v691 = vadd.f32 0.0, %v690
        %v692 = vpop.f32.mrf.mxu0
        %v693 = vadd.f32 0.0, %v692
        %694 = vmatprep.mubr.f32.mxu0 0.0
        %695 = vmatmul.mubr.f32.gmra.mxu0 %v562
        %v696 = vpop.f32.mrf.mxu0
        %v697 = vadd.f32 0.0, %v696
        %v698 = vpop.f32.mrf.mxu0
        %v699 = vadd.f32 0.0, %v698
        %700 = vmatprep.mubr.f32.mxu0 0.0
        %701 = vmatmul.mubr.f32.gmra.mxu0 %v565
        %v702 = vpop.f32.mrf.mxu0
        %v703 = vadd.f32 0.0, %v702
        %v704 = vpop.f32.mrf.mxu0
        %v705 = vadd.f32 0.0, %v704
        %706 = vmatprep.mubr.f32.mxu0 0.0
        %707 = vmatmul.mubr.f32.gmra.mxu0 %v568
        %v708 = vpop.f32.mrf.mxu0
        %v709 = vadd.f32 0.0, %v708
        %v710 = vpop.f32.mrf.mxu0
        %v711 = vadd.f32 0.0, %v710
        %712 = vmatprep.mubr.f32.mxu0 0.0
        %713 = vmatmul.mubr.f32.gmra.mxu0 %v571
        %v714 = vpop.f32.mrf.mxu0
        %v715 = vadd.f32 0.0, %v714
        %v716 = vpop.f32.mrf.mxu0
        %v717 = vadd.f32 0.0, %v716
        %718 = vmatprep.mubr.f32.mxu0 0.0
        %719 = vmatmul.mubr.f32.gmra.mxu0 %v574
        %v720 = vpop.f32.mrf.mxu0
        %v721 = vadd.f32 0.0, %v720
        %v722 = vpop.f32.mrf.mxu0
        %v723 = vadd.f32 0.0, %v722
        %724 = vmatprep.mubr.f32.mxu0 0.0
        %725 = vmatmul.mubr.f32.gmra.mxu0 %v577
        %v726 = vpop.f32.mrf.mxu0
        %v727 = vadd.f32 0.0, %v726
        %v728 = vpop.f32.mrf.mxu0
        %v729 = vadd.f32 0.0, %v728
        %730 = vmatprep.mubr.f32.mxu0 0.0
        %731 = vmatmul.mubr.f32.gmra.mxu0 %v580
        %v732 = vpop.f32.mrf.mxu0
        %v733 = vadd.f32 0.0, %v732
        %v734 = vpop.f32.mrf.mxu0
        %v735 = vadd.f32 0.0, %v734
        %736 = vmatprep.mubr.f32.mxu0 0.0
        %737 = vmatmul.mubr.f32.gmra.mxu0 %v583
        %v738 = vpop.f32.mrf.mxu0
        %v739 = vadd.f32 0.0, %v738
        %v740 = vpop.f32.mrf.mxu0
        %v741 = vadd.f32 0.0, %v740
        %742 = vmatprep.mubr.f32.mxu0 0.0
        %743 = vmatmul.mubr.f32.gmra.mxu0 %v586
        %v744 = vpop.f32.mrf.mxu0
        %v745 = vadd.f32 0.0, %v744
        %v746 = vpop.f32.mrf.mxu0
        %v747 = vadd.f32 0.0, %v746
        %748 = vdwg.mxu0
        %v749 = vadd.f32 %v491, %v655
        %v750 = vadd.f32 %v492, %v657
        %v751 = vadd.f32 %v493, %v661
        %v752 = vadd.f32 %v494, %v663
        %v753 = vadd.f32 %v495, %v667
        %v754 = vadd.f32 %v496, %v669
        %v755 = vadd.f32 %v497, %v673
        %v756 = vadd.f32 %v498, %v675
        %v757 = vadd.f32 %v499, %v679
        %v758 = vadd.f32 %v500, %v681
        %v759 = vadd.f32 %v501, %v685
        %v760 = vadd.f32 %v502, %v687
        %v761 = vadd.f32 %v503, %v691
        %v762 = vadd.f32 %v504, %v693
        %v763 = vadd.f32 %v505, %v697
        %v764 = vadd.f32 %v506, %v699
        %v765 = vadd.f32 %v507, %v703
        %v766 = vadd.f32 %v508, %v705
        %v767 = vadd.f32 %v509, %v709
        %v768 = vadd.f32 %v510, %v711
        %v769 = vadd.f32 %v511, %v715
        %v770 = vadd.f32 %v512, %v717
        %v771 = vadd.f32 %v513, %v721
        %v772 = vadd.f32 %v514, %v723
        %v773 = vadd.f32 %v515, %v727
        %v774 = vadd.f32 %v516, %v729
        %v775 = vadd.f32 %v517, %v733
        %v776 = vadd.f32 %v518, %v735
        %v777 = vadd.f32 %v519, %v739
        %v778 = vadd.f32 %v520, %v741
        %v779 = vadd.f32 %v521, %v745
        %v780 = vadd.f32 %v522, %v747
        %781 = vst [vmem:[#allocation2] sm:$0xff] %v749
        %782 = vst [vmem:[#allocation2 + $0x8] sm:$0xff] %v750
        %783 = vst [vmem:[#allocation2 + $0x10] sm:$0xff] %v751
        %784 = vst [vmem:[#allocation2 + $0x18] sm:$0xff] %v752
        %785 = vst [vmem:[#allocation2 + $0x20] sm:$0xff] %v753
        %786 = vst [vmem:[#allocation2 + $0x28] sm:$0xff] %v754
        %787 = vst [vmem:[#allocation2 + $0x30] sm:$0xff] %v755
        %788 = vst [vmem:[#allocation2 + $0x38] sm:$0xff] %v756
        %789 = vst [vmem:[#allocation2 + $0x40] sm:$0xff] %v757
        %790 = vst [vmem:[#allocation2 + $0x48] sm:$0xff] %v758
        %791 = vst [vmem:[#allocation2 + $0x50] sm:$0xff] %v759
        %792 = vst [vmem:[#allocation2 + $0x58] sm:$0xff] %v760
        %793 = vst [vmem:[#allocation2 + $0x60] sm:$0xff] %v761
        %794 = vst [vmem:[#allocation2 + $0x68] sm:$0xff] %v762
        %795 = vst [vmem:[#allocation2 + $0x70] sm:$0xff] %v763
        %796 = vst [vmem:[#allocation2 + $0x78] sm:$0xff] %v764
        %797 = vst [vmem:[#allocation2 + $0x80] sm:$0xff] %v765
        %798 = vst [vmem:[#allocation2 + $0x88] sm:$0xff] %v766
        %799 = vst [vmem:[#allocation2 + $0x90] sm:$0xff] %v767
        %800 = vst [vmem:[#allocation2 + $0x98] sm:$0xff] %v768
        %801 = vst [vmem:[#allocation2 + $0xa0] sm:$0xff] %v769
        %802 = vst [vmem:[#allocation2 + $0xa8] sm:$0xff] %v770
        %803 = vst [vmem:[#allocation2 + $0xb0] sm:$0xff] %v771
        %804 = vst [vmem:[#allocation2 + $0xb8] sm:$0xff] %v772
        %805 = vst [vmem:[#allocation2 + $0xc0] sm:$0xff] %v773
        %806 = vst [vmem:[#allocation2 + $0xc8] sm:$0xff] %v774
        %807 = vst [vmem:[#allocation2 + $0xd0] sm:$0xff] %v775
        %808 = vst [vmem:[#allocation2 + $0xd8] sm:$0xff] %v776
        %809 = vst [vmem:[#allocation2 + $0xe0] sm:$0xff] %v777
        %810 = vst [vmem:[#allocation2 + $0xe8] sm:$0xff] %v778
        %811 = vst [vmem:[#allocation2 + $0xf0] sm:$0xff] %v779
        %812 = vst [vmem:[#allocation2 + $0xf8] sm:$0xff] %v780
        // Predicated region
        $region41: #{tpu_custom_call.1} parent=35 // pred_check
          %p813 = pneg %p280
        $region42: #{tpu_custom_call.1} parent=35 // pred_check_branch
          %815 = sbr.rel (%p813) target = $region44
        $region43: #{tpu_custom_call.1} parent=35 // pred_region
          %v816 = vld [vmem:[#allocation2] sm:$0xff]
          %v817 = vld [vmem:[#allocation2 + $0x8] sm:$0xff]
          %v818 = vld [vmem:[#allocation2 + $0x10] sm:$0xff]
          %v819 = vld [vmem:[#allocation2 + $0x18] sm:$0xff]
          %v820 = vld [vmem:[#allocation2 + $0x20] sm:$0xff]
          %v821 = vld [vmem:[#allocation2 + $0x28] sm:$0xff]
          %v822 = vld [vmem:[#allocation2 + $0x30] sm:$0xff]
          %v823 = vld [vmem:[#allocation2 + $0x38] sm:$0xff]
          %v824 = vld [vmem:[#allocation2 + $0x40] sm:$0xff]
          %v825 = vld [vmem:[#allocation2 + $0x48] sm:$0xff]
          %v826 = vld [vmem:[#allocation2 + $0x50] sm:$0xff]
          %v827 = vld [vmem:[#allocation2 + $0x58] sm:$0xff]
          %v828 = vld [vmem:[#allocation2 + $0x60] sm:$0xff]
          %v829 = vld [vmem:[#allocation2 + $0x68] sm:$0xff]
          %v830 = vld [vmem:[#allocation2 + $0x70] sm:$0xff]
          %v831 = vld [vmem:[#allocation2 + $0x78] sm:$0xff]
          %v832 = vld [vmem:[#allocation2 + $0x80] sm:$0xff]
          %v833 = vld [vmem:[#allocation2 + $0x88] sm:$0xff]
          %v834 = vld [vmem:[#allocation2 + $0x90] sm:$0xff]
          %v835 = vld [vmem:[#allocation2 + $0x98] sm:$0xff]
          %v836 = vld [vmem:[#allocation2 + $0xa0] sm:$0xff]
          %v837 = vld [vmem:[#allocation2 + $0xa8] sm:$0xff]
          %v838 = vld [vmem:[#allocation2 + $0xb0] sm:$0xff]
          %v839 = vld [vmem:[#allocation2 + $0xb8] sm:$0xff]
          %v840 = vld [vmem:[#allocation2 + $0xc0] sm:$0xff]
          %v841 = vld [vmem:[#allocation2 + $0xc8] sm:$0xff]
          %v842 = vld [vmem:[#allocation2 + $0xd0] sm:$0xff]
          %v843 = vld [vmem:[#allocation2 + $0xd8] sm:$0xff]
          %v844 = vld [vmem:[#allocation2 + $0xe0] sm:$0xff]
          %v845 = vld [vmem:[#allocation2 + $0xe8] sm:$0xff]
          %v846 = vld [vmem:[#allocation2 + $0xf0] sm:$0xff]
          %v847 = vld [vmem:[#allocation2 + $0xf8] sm:$0xff]
          %848 = vxpose.xlu0.b32.start [1/16] %v816, 128
          %849 = vxpose.xlu0.b32.cont [2/16] %v818, 128
          %850 = vxpose.xlu0.b32.cont [3/16] %v820, 128
          %851 = vxpose.xlu0.b32.cont [4/16] %v822, 128
          %852 = vxpose.xlu0.b32.cont [5/16] %v824, 128
          %853 = vxpose.xlu0.b32.cont [6/16] %v826, 128
          %854 = vxpose.xlu0.b32.cont [7/16] %v828, 128
          %855 = vxpose.xlu0.b32.cont [8/16] %v830, 128
          %856 = vxpose.xlu0.b32.cont [9/16] %v832, 128
          %857 = vxpose.xlu0.b32.cont [10/16] %v834, 128
          %858 = vxpose.xlu0.b32.cont [11/16] %v836, 128
          %859 = vxpose.xlu0.b32.cont [12/16] %v838, 128
          %860 = vxpose.xlu0.b32.cont [13/16] %v840, 128
          %861 = vxpose.xlu0.b32.cont [14/16] %v842, 128
          %862 = vxpose.xlu0.b32.cont [15/16] %v844, 128
          %863 = vxpose.xlu0.b32.end [16/16] %v846, 128
          %v864 = vpop.trf.xlu0
          %v865 = vpop.trf.xlu0
          %v866 = vpop.trf.xlu0
          %v867 = vpop.trf.xlu0
          %v868 = vpop.trf.xlu0
          %v869 = vpop.trf.xlu0
          %v870 = vpop.trf.xlu0
          %v871 = vpop.trf.xlu0
          %v872 = vpop.trf.xlu0
          %v873 = vpop.trf.xlu0
          %v874 = vpop.trf.xlu0
          %v875 = vpop.trf.xlu0
          %v876 = vpop.trf.xlu0
          %v877 = vpop.trf.xlu0
          %v878 = vpop.trf.xlu0
          %v879 = vpop.trf.xlu0
          %v880 = vpack.c.bf16 %v865, %v864
          %v881 = vpack.c.bf16 %v867, %v866
          %v882 = vpack.c.bf16 %v869, %v868
          %v883 = vpack.c.bf16 %v871, %v870
          %v884 = vpack.c.bf16 %v873, %v872
          %v885 = vpack.c.bf16 %v875, %v874
          %v886 = vpack.c.bf16 %v877, %v876
          %v887 = vpack.c.bf16 %v879, %v878
          %v896 = vunpack.c.l.b16 %v880
          %v897 = vunpack.c.h.b16 %v880
          %v898 = vunpack.c.l.b16 %v881
          %v899 = vunpack.c.h.b16 %v881
          %v900 = vunpack.c.l.b16 %v882
          %v901 = vunpack.c.h.b16 %v882
          %v902 = vunpack.c.l.b16 %v883
          %v903 = vunpack.c.h.b16 %v883
          %v904 = vunpack.c.l.b16 %v884
          %v905 = vunpack.c.h.b16 %v884
          %v906 = vunpack.c.l.b16 %v885
          %v907 = vunpack.c.h.b16 %v885
          %v908 = vunpack.c.l.b16 %v886
          %v909 = vunpack.c.h.b16 %v886
          %v910 = vunpack.c.l.b16 %v887
          %v911 = vunpack.c.h.b16 %v887
          %v912 = vpack.c.b16 %v896, %v896
          %v913 = vpack.c.b16 %v897, %v897
          %v914 = vpack.c.b16 %v898, %v898
          %v915 = vpack.c.b16 %v899, %v899
          %v916 = vpack.c.b16 %v900, %v900
          %v917 = vpack.c.b16 %v901, %v901
          %v918 = vpack.c.b16 %v902, %v902
          %v919 = vpack.c.b16 %v903, %v903
          %v920 = vpack.c.b16 %v904, %v904
          %v921 = vpack.c.b16 %v905, %v905
          %v922 = vpack.c.b16 %v906, %v906
          %v923 = vpack.c.b16 %v907, %v907
          %v924 = vpack.c.b16 %v908, %v908
          %v925 = vpack.c.b16 %v909, %v909
          %v926 = vpack.c.b16 %v910, %v910
          %v927 = vpack.c.b16 %v911, %v911
          %944 = vst [vmem:[%s257] sm:$0xf] %v912
          %945 = vst [vmem:[%s257 + $0x4] sm:$0xf] %v913
          %946 = vst [vmem:[%s257 + $0x8] sm:$0xf] %v914
          %947 = vst [vmem:[%s257 + $0xc] sm:$0xf] %v915
          %948 = vst [vmem:[%s257 + $0x10] sm:$0xf] %v916
          %949 = vst [vmem:[%s257 + $0x14] sm:$0xf] %v917
          %950 = vst [vmem:[%s257 + $0x18] sm:$0xf] %v918
          %951 = vst [vmem:[%s257 + $0x1c] sm:$0xf] %v919
          %952 = vst [vmem:[%s257 + $0x20] sm:$0xf] %v920
          %953 = vst [vmem:[%s257 + $0x24] sm:$0xf] %v921
          %954 = vst [vmem:[%s257 + $0x28] sm:$0xf] %v922
          %955 = vst [vmem:[%s257 + $0x2c] sm:$0xf] %v923
          %956 = vst [vmem:[%s257 + $0x30] sm:$0xf] %v924
          %957 = vst [vmem:[%s257 + $0x34] sm:$0xf] %v925
          %958 = vst [vmem:[%s257 + $0x38] sm:$0xf] %v926
          %959 = vst [vmem:[%s257 + $0x3c] sm:$0xf] %v927
          %v960 = vpack.c.bf16 %v819, %v817
          %v961 = vpack.c.bf16 %v823, %v821
          %v962 = vpack.c.bf16 %v827, %v825
          %v963 = vpack.c.bf16 %v831, %v829
          %v964 = vpack.c.bf16 %v835, %v833
          %v965 = vpack.c.bf16 %v839, %v837
          %v966 = vpack.c.bf16 %v843, %v841
          %v967 = vpack.c.bf16 %v847, %v845
          %v976 = vunpack.c.l.b16 %v960
          %v977 = vunpack.c.h.b16 %v960
          %v978 = vunpack.c.l.b16 %v961
          %v979 = vunpack.c.h.b16 %v961
          %v980 = vunpack.c.l.b16 %v962
          %v981 = vunpack.c.h.b16 %v962
          %v982 = vunpack.c.l.b16 %v963
          %v983 = vunpack.c.h.b16 %v963
          %v984 = vunpack.c.l.b16 %v964
          %v985 = vunpack.c.h.b16 %v964
          %v986 = vunpack.c.l.b16 %v965
          %v987 = vunpack.c.h.b16 %v965
          %v988 = vunpack.c.l.b16 %v966
          %v989 = vunpack.c.h.b16 %v966
          %v990 = vunpack.c.l.b16 %v967
          %v991 = vunpack.c.h.b16 %v967
          %v992 = vpack.c.b16 %v976, %v976
          %v993 = vpack.c.b16 %v977, %v977
          %v994 = vpack.c.b16 %v978, %v978
          %v995 = vpack.c.b16 %v979, %v979
          %v996 = vpack.c.b16 %v980, %v980
          %v997 = vpack.c.b16 %v981, %v981
          %v998 = vpack.c.b16 %v982, %v982
          %v999 = vpack.c.b16 %v983, %v983
          %v1000 = vpack.c.b16 %v984, %v984
          %v1001 = vpack.c.b16 %v985, %v985
          %v1002 = vpack.c.b16 %v986, %v986
          %v1003 = vpack.c.b16 %v987, %v987
          %v1004 = vpack.c.b16 %v988, %v988
          %v1005 = vpack.c.b16 %v989, %v989
          %v1006 = vpack.c.b16 %v990, %v990
          %v1007 = vpack.c.b16 %v991, %v991
          %1024 = vst [vmem:[%s264] sm:$0xf] %v992
          %1025 = vst [vmem:[%s264 + $0x4] sm:$0xf] %v993
          %1026 = vst [vmem:[%s264 + $0x8] sm:$0xf] %v994
          %1027 = vst [vmem:[%s264 + $0xc] sm:$0xf] %v995
          %1028 = vst [vmem:[%s264 + $0x10] sm:$0xf] %v996
          %1029 = vst [vmem:[%s264 + $0x14] sm:$0xf] %v997
          %1030 = vst [vmem:[%s264 + $0x18] sm:$0xf] %v998
          %1031 = vst [vmem:[%s264 + $0x1c] sm:$0xf] %v999
          %1032 = vst [vmem:[%s264 + $0x20] sm:$0xf] %v1000
          %1033 = vst [vmem:[%s264 + $0x24] sm:$0xf] %v1001
          %1034 = vst [vmem:[%s264 + $0x28] sm:$0xf] %v1002
          %1035 = vst [vmem:[%s264 + $0x2c] sm:$0xf] %v1003
          %1036 = vst [vmem:[%s264 + $0x30] sm:$0xf] %v1004
          %1037 = vst [vmem:[%s264 + $0x34] sm:$0xf] %v1005
          %1038 = vst [vmem:[%s264 + $0x38] sm:$0xf] %v1006
          %1039 = vst [vmem:[%s264 + $0x3c] sm:$0xf] %v1007
        $region44: #{tpu_custom_call.1} parent=35 // pred_fallthru
          _
        %s1040 = sand.u32 %s139, 1
        %s1041 = scalar_lea.sflag [#allocation4], %s1040
        %s1042 = sand.u32 %s139, 1
        %s1043 = smul.addr %s1042, 64
        %s1044 = scalar_lea.vmem [#allocation3], %s1043
        %s1045 = sand.u32 %s165, 1
        %s1046 = scalar_lea.sflag [#allocation6], %s1045
        %s1047 = sand.u32 %s165, 1
        %s1048 = smul.addr %s1047, 64
        %s1049 = scalar_lea.vmem [#allocation5], %s1048
        // Predicated region
        $region45: #{tpu_custom_call.1} parent=35 // pred_check
          %p1050 = pneg %p149
        $region46: #{tpu_custom_call.1} parent=35 // pred_check_branch
          %1052 = sbr.rel (%p1050) target = $region48
        $region47: #{tpu_custom_call.1} parent=35 // pred_region
          %s1054 = ssub.s32 1024, 1024
          %1055 = vsyncadd %s1041, %s1054
          %s1056 = smul.addr %s27, 16
          %s1057 = smul.addr %s1056, 64
          %s1058 = scalar_lea.hbm %s4, %s1057
          %s1059 = sshll.u32 %s1044, 4
          %s1060 = int_to_ptr.vmem [resolvable:$true] %s1059
          %1065 = dma.vmem_to_hbm [thread:$0]  %s1060, 1024, %s1058, %s1041, 64, 64, 4
        $region48: #{tpu_custom_call.1} parent=35 // pred_fallthru
          _
        // Predicated region
        $region49: #{tpu_custom_call.1} parent=35 // pred_check
          %p1066 = pneg %p175
        $region50: #{tpu_custom_call.1} parent=35 // pred_check_branch
          %1068 = sbr.rel (%p1066) target = $region52
        $region51: #{tpu_custom_call.1} parent=35 // pred_region
          %s1070 = ssub.s32 1024, 1024
          %1071 = vsyncadd %s1046, %s1070
          %s1072 = smul.addr %s27, 16
          %s1073 = smul.addr %s1072, 64
          %s1074 = scalar_lea.hbm %s5, %s1073
          %s1075 = sshll.u32 %s1049, 4
          %s1076 = int_to_ptr.vmem [resolvable:$true] %s1075
          %1081 = dma.vmem_to_hbm [thread:$0]  %s1076, 1024, %s1074, %s1046, 64, 64, 4
        $region52: #{tpu_custom_call.1} parent=35 // pred_fallthru
          _
      $region36: #{tpu_custom_call.1} parent=5 // pred_fallthru
        _
      %p1082 = scmp.le.s32.totalorder 2, %s18
      // Predicated region
      $region53: #{tpu_custom_call.1} parent=5 // pred_check
        %p1083 = pneg %p1082
      $region54: #{tpu_custom_call.1} parent=5 // pred_check_branch
        %1085 = sbr.rel (%p1083) target = $region56
      $region55: #{tpu_custom_call.1} parent=5 // pred_region
        %s1086 = ssub.s32 %s18, 2
        // Predicated region
        $region57: #{tpu_custom_call.1} parent=55 // pred_check
          %p1087 = pneg %p155
        $region58: #{tpu_custom_call.1} parent=55 // pred_check_branch
          %1089 = sbr.rel (%p1087) target = $region60
        $region59: #{tpu_custom_call.1} parent=55 // pred_region
          %s1090 = sand.u32 %s140, 1
          %s1091 = scalar_lea.sflag [#allocation4], %s1090
          %s1092 = sand.u32 %s140, 1
          %s1093 = smul.addr %s1092, 64
          %s1094 = scalar_lea.vmem [#allocation3], %s1093
          %1095 = dma.done %s1091, 1024
        $region60: #{tpu_custom_call.1} parent=55 // pred_fallthru
          _
        // Predicated region
        $region61: #{tpu_custom_call.1} parent=55 // pred_check
          %p1096 = pneg %p181
        $region62: #{tpu_custom_call.1} parent=55 // pred_check_branch
          %1098 = sbr.rel (%p1096) target = $region64
        $region63: #{tpu_custom_call.1} parent=55 // pred_region
          %s1099 = sand.u32 %s166, 1
          %s1100 = scalar_lea.sflag [#allocation6], %s1099
          %s1101 = sand.u32 %s166, 1
          %s1102 = smul.addr %s1101, 64
          %s1103 = scalar_lea.vmem [#allocation5], %s1102
          %1104 = dma.done %s1100, 1024
        $region64: #{tpu_custom_call.1} parent=55 // pred_fallthru
          _
      $region56: #{tpu_custom_call.1} parent=5 // pred_fallthru
        _
    $region6: #{tpu_custom_call.1} parent=1 // loop_footer
      %s22 = sadd.s32 1, %s18
    $region7: #{tpu_custom_call.1} parent=1 // loop_footer_branch
      %17 = sbr.rel target = $region3
    $region8: #{tpu_custom_call.1} parent=1 // loop_exit
      _
    %1105 = vsyncpa [#allocation4], 1
    %s1106 = scalar_lea.sflag [#allocation4], 1
    %1107 = vsyncpa %s1106, 1
    %1108 = vsyncpa [#allocation6], 1
    %s1109 = scalar_lea.sflag [#allocation6], 1
    %1110 = vsyncpa %s1109, 1

</llo_original>
